<compile_context>
chip_gen: v5e
topology: v5e:2x2
jax: 0.10.0
libtpu: 0.0.40
codegen_flags: <defaults>
</compile_context>

<pallas_src>
import jax
import jax.numpy as jnp
from jax.experimental import pallas as pl
from jax.experimental.pallas import tpu as pltpu

LANE = 128  # vreg lane width / MXU-friendly granularity


def _round_up(n, m):
    return ((n + m - 1) // m) * m


def _pad_dim(a, axis, mult):
    """Zero-pad `axis` of `a` up to the next multiple of `mult`."""
    size = a.shape[axis]
    pad = (-size) % mult
    if pad == 0:
        return a
    widths = [(0, 0)] * a.ndim
    widths[axis] = (0, pad)
    return jnp.pad(a, widths)


def prepare_mlp_params(w1, b1, w2, b2):
    """One-time (init) param prep hoisted out of the forward hot path.

    - biases normalized to (1, D)
    - hidden/output lane dims zero-padded to multiples of 128
      (numerically neutral: padded h columns are relu(0+0)=0 and hit
       zero rows of the padded W2)
    - weights cast to bf16 (MXU operand dtype), biases kept f32.
    """
    if b1.ndim == 1:
        b1 = b1[None, :]
    if b2.ndim == 1:
        b2 = b2[None, :]
    d_out = w2.shape[1]
    w1p = _pad_dim(w1, 1, LANE).astype(jnp.bfloat16)
    b1p = _pad_dim(b1, 1, LANE).astype(jnp.float32)
    w2p = _pad_dim(_pad_dim(w2, 0, LANE), 1, LANE).astype(jnp.bfloat16)
    b2p = _pad_dim(b2, 1, LANE).astype(jnp.float32)
    return (w1p, b1p, w2p, b2p, d_out)


def mlp_kernel(x_ref, w1_ref, b1_ref, w2_ref, b2_ref, o_ref):
    # Fused: h = relu(x @ W1 + b1); o = h @ W2 + b2
    # x arrives f32 from HBM; cast to bf16 on the VPU (free under MXU slack).
    x = x_ref[...].astype(jnp.bfloat16)
    h = jnp.dot(x, w1_ref[...], preferred_element_type=jnp.float32)
    h = jnp.maximum(h + b1_ref[...], 0.0)                 # (TM, D_hid_p) f32
    o = jnp.dot(h.astype(jnp.bfloat16), w2_ref[...],
                preferred_element_type=jnp.float32)
    o_ref[...] = (o + b2_ref[...]).astype(o_ref.dtype)


def model_encaupsulation_forward(x, params, *, out_dtype=None):
    """Forward pass. `params` comes from prepare_mlp_params (init-time)."""
    w1p, b1p, w2p, b2p, d_out = params
    B, d_in = x.shape
    d_hid_p = w1p.shape[1]
    d_out_p = w2p.shape[1]
    out_dtype = x.dtype if out_dtype is None else jnp.dtype(out_dtype)

    # Batch tile: large enough to amortize per-step pipeline overhead, but keep
    # >= 2 grid steps (when B allows) so "parallel" can shard over v7x's 2 TCs.
    tm = min(512, max(8, _round_up(pl.cdiv(B, 2), 8)))
    grid = (pl.cdiv(B, tm),)  # ragged last block is fine: rows are independent

    flops = 2 * B * (d_in * d_hid_p + d_hid_p * d_out_p)
    bytes_accessed = (
        x.size * x.dtype.itemsize
        + w1p.size * 2 + w2p.size * 2
        + b1p.size * 4 + b2p.size * 4
        + B * d_out_p * jnp.dtype(out_dtype).itemsize
    )

    # VMEM estimate: double-buffered x/out slabs + resident weights (x2 bufs)
    # + f32 intermediate h. Only override the scoped limit if actually needed.
    vmem_est = (
        2 * tm * d_in * x.dtype.itemsize
        + 2 * tm * d_out_p * jnp.dtype(out_dtype).itemsize
        + 2 * (w1p.size * 2 + w2p.size * 2)
        + 2 * (b1p.size * 4 + b2p.size * 4)
        + tm * d_hid_p * 4
    )
    cp_kwargs = dict(dimension_semantics=("parallel",))
    if vmem_est > 16 * 1024 * 1024:  # v5e default scoped VMEM is the tightest
        cp_kwargs["vmem_limit_bytes"] = int(min(2 * vmem_est, 64 * 1024 * 1024))

    out = pl.pallas_call(
        mlp_kernel,
        out_shape=jax.ShapeDtypeStruct((B, d_out_p), out_dtype),
        grid=grid,
        in_specs=[
            # x streams through the pipeline, one TM-row slab per grid step
            # (last dim = full d_in, so no lane padding of x is ever needed).
            pl.BlockSpec((tm, d_in), lambda i: (i, 0)),
            # Weights / biases: same block every step -> stay VMEM-resident.
            pl.BlockSpec((w1p.shape[0], d_hid_p), lambda i: (0, 0)),
            pl.BlockSpec((1, d_hid_p), lambda i: (0, 0)),
            pl.BlockSpec((d_hid_p, d_out_p), lambda i: (0, 0)),
            pl.BlockSpec((1, d_out_p), lambda i: (0, 0)),
        ],
        out_specs=pl.BlockSpec((tm, d_out_p), lambda i: (i, 0)),
        compiler_params=pltpu.CompilerParams(**cp_kwargs),
        cost_estimate=pl.CostEstimate(
            flops=flops, transcendentals=0, bytes_accessed=bytes_accessed
        ),
    )(x, w1p, b1p, w2p, b2p)

    # Strip output lane padding (no-op when d_out is already 128-aligned).
    if d_out_p != d_out:
        out = out[:, :d_out]
    return out


if __name__ == "__main__":
    # Lane-aligned, modest shapes: 256 x 128 x 256 x 128.
    B, D_in, D_hid, D_out = 256, 128, 256, 128

    key = jax.random.PRNGKey(0)
    kx, k1, kb1, k2, kb2 = jax.random.split(key, 5)

    x = jax.random.normal(kx, (B, D_in), dtype=jnp.float32)
    w1 = jax.random.normal(k1, (D_in, D_hid), dtype=jnp.float32) * 0.1
    b1 = jax.random.normal(kb1, (D_hid,), dtype=jnp.float32) * 0.1
    w2 = jax.random.normal(k2, (D_hid, D_out), dtype=jnp.float32) * 0.1
    b2 = jax.random.normal(kb2, (D_out,), dtype=jnp.float32) * 0.1

    # One-time parameter prep (padding + bf16 cast), hoisted out of the hot path.
    params = prepare_mlp_params(w1, b1, w2, b2)

    out = jax.block_until_ready(model_encaupsulation_forward(x, params))

    # Pure-JAX reference mirroring the kernel's numerics (bf16 matmul operands,
    # f32 accumulation / bias / ReLU).
    xb = x.astype(jnp.bfloat16).astype(jnp.float32)
    w1b = w1.astype(jnp.bfloat16).astype(jnp.float32)
    w2b = w2.astype(jnp.bfloat16).astype(jnp.float32)
    h = jnp.maximum(xb @ w1b + b1[None, :], 0.0)
    ref = h.astype(jnp.bfloat16).astype(jnp.float32) @ w2b + b2[None, :]

    assert out.shape == (B, D_out)
    assert out.dtype == jnp.float32
    assert jnp.allclose(out, ref, atol=2e-2, rtol=2e-2), float(
        jnp.max(jnp.abs(out - ref))
    )

    print("KERNEL_OK")
</pallas_src>

<mosaic_0001>
module attributes {stable_mosaic.version = 11 : i64} {
  func.func @mlp_kernel(%arg0: i32, %arg1: memref<128x128xf32, #tpu.memory_space<vmem>>, %arg2: memref<128x256xbf16, #tpu.memory_space<vmem>>, %arg3: memref<1x256xf32, #tpu.memory_space<vmem>>, %arg4: memref<256x128xbf16, #tpu.memory_space<vmem>>, %arg5: memref<1x128xf32, #tpu.memory_space<vmem>>, %arg6: memref<128x128xf32, #tpu.memory_space<vmem>>) attributes {dimension_semantics = [#tpu.dimension_semantics<parallel>], iteration_bounds = array<i64: 2>, scalar_prefetch = 0 : i64, scratch_operands = 0 : i64, tpu.core_type = #tpu.core_type<tc>, window_params = [{transform_indices = @transform_0, window_bounds = array<i64: 128, 128>}, {pipeline_mode = #tpu.pipeline_mode<synchronous>, transform_indices = @transform_1, window_bounds = array<i64: 128, 256>}, {pipeline_mode = #tpu.pipeline_mode<synchronous>, transform_indices = @transform_2, window_bounds = array<i64: 1, 256>}, {pipeline_mode = #tpu.pipeline_mode<synchronous>, transform_indices = @transform_3, window_bounds = array<i64: 256, 128>}, {pipeline_mode = #tpu.pipeline_mode<synchronous>, transform_indices = @transform_4, window_bounds = array<i64: 1, 128>}, {transform_indices = @transform_5, window_bounds = array<i64: 128, 128>}]} {
    %c0 = arith.constant 0 : index
    %c0_0 = arith.constant 0 : index
    %0 = vector.load %arg1[%c0, %c0_0] : memref<128x128xf32, #tpu.memory_space<vmem>>, vector<128x128xf32>
    %1 = arith.truncf %0 : vector<128x128xf32> to vector<128x128xbf16>
    %c0_1 = arith.constant 0 : index
    %c0_2 = arith.constant 0 : index
    %2 = vector.load %arg2[%c0_1, %c0_2] : memref<128x256xbf16, #tpu.memory_space<vmem>>, vector<128x256xbf16>
    %cst = arith.constant dense<0.000000e+00> : vector<128x256xf32>
    %3 = tpu.matmul %1, %2, %cst {dimension_numbers = #tpu.dot_dimension_numbers<[1], [0], [0], [1], [0, 0, 1, 1], [], []>} : vector<128x128xbf16>, vector<128x256xbf16>, vector<128x256xf32> -> vector<128x256xf32>
    %c0_3 = arith.constant 0 : index
    %c0_4 = arith.constant 0 : index
    %4 = vector.load %arg3[%c0_3, %c0_4] : memref<1x256xf32, #tpu.memory_space<vmem>>, vector<1x256xf32>
    %5 = vector.broadcast %4 : vector<1x256xf32> to vector<128x256xf32>
    %6 = arith.addf %3, %5 : vector<128x256xf32>
    %cst_5 = arith.constant 0.000000e+00 : f32
    %7 = vector.broadcast %cst_5 : f32 to vector<128x256xf32>
    %8 = arith.maximumf %6, %7 : vector<128x256xf32>
    %9 = arith.truncf %8 : vector<128x256xf32> to vector<128x256xbf16>
    %c0_6 = arith.constant 0 : index
    %c0_7 = arith.constant 0 : index
    %10 = vector.load %arg4[%c0_6, %c0_7] : memref<256x128xbf16, #tpu.memory_space<vmem>>, vector<256x128xbf16>
    %cst_8 = arith.constant dense<0.000000e+00> : vector<128x128xf32>
    %11 = tpu.matmul %9, %10, %cst_8 {dimension_numbers = #tpu.dot_dimension_numbers<[1], [0], [0], [1], [0, 0, 1, 1], [], []>} : vector<128x256xbf16>, vector<256x128xbf16>, vector<128x128xf32> -> vector<128x128xf32>
    %c0_9 = arith.constant 0 : index
    %c0_10 = arith.constant 0 : index
    %12 = vector.load %arg5[%c0_9, %c0_10] : memref<1x128xf32, #tpu.memory_space<vmem>>, vector<1x128xf32>
    %13 = vector.broadcast %12 : vector<1x128xf32> to vector<128x128xf32>
    %14 = arith.addf %11, %13 : vector<128x128xf32>
    %c0_11 = arith.constant 0 : index
    %c0_12 = arith.constant 0 : index
    %15 = vector.load %arg6[%c0_11, %c0_12] : memref<128x128xf32, #tpu.memory_space<vmem>>, vector<128x128xf32>
    tpu.vector_store %arg6[%c0_11, %c0_12], %14 {strides = array<i32>} : memref<128x128xf32, #tpu.memory_space<vmem>>, vector<128x128xf32>,
    return
  }
  func.func @transform_0(%arg0: i32) -> (i32, i32) {
    %c0_i32 = arith.constant 0 : i32
    %c0_i32_0 = arith.constant 0 : i32
    return %arg0, %c0_i32 : i32, i32
  }
  func.func @transform_1(%arg0: i32) -> (i32, i32) {
    %c0_i32 = arith.constant 0 : i32
    %c0_i32_0 = arith.constant 0 : i32
    %c0_i32_1 = arith.constant 0 : i32
    return %c0_i32, %c0_i32_0 : i32, i32
  }
  func.func @transform_2(%arg0: i32) -> (i32, i32) {
    %c0_i32 = arith.constant 0 : i32
    %c0_i32_0 = arith.constant 0 : i32
    %c0_i32_1 = arith.constant 0 : i32
    return %c0_i32, %c0_i32_0 : i32, i32
  }
  func.func @transform_3(%arg0: i32) -> (i32, i32) {
    %c0_i32 = arith.constant 0 : i32
    %c0_i32_0 = arith.constant 0 : i32
    %c0_i32_1 = arith.constant 0 : i32
    return %c0_i32, %c0_i32_0 : i32, i32
  }
  func.func @transform_4(%arg0: i32) -> (i32, i32) {
    %c0_i32 = arith.constant 0 : i32
    %c0_i32_0 = arith.constant 0 : i32
    %c0_i32_1 = arith.constant 0 : i32
    return %c0_i32, %c0_i32_0 : i32, i32
  }
  func.func @transform_5(%arg0: i32) -> (i32, i32) {
    %c0_i32 = arith.constant 0 : i32
    %c0_i32_0 = arith.constant 0 : i32
    return %arg0, %c0_i32 : i32, i32
  }
}

</mosaic_0001>

<llo_original>
// kernel: tpu_custom_call.1
$region0: #{tpu_custom_call.1}
  #allocation0 [shape = 'u32[]', space=smem, size = 0x4, offset = 0x4, fixed_abs, tag = 'smem constant byte address 0x4 - core index']
  #allocation1 [shape = 'u32[72,128]{1,0:T(1,128)}', space=vmem, size = 0x9000, scoped, tag = 'internal scratch']
  %s0 = inlined_call_operand.hbm [shape: f32[256,128], index: 0, kind: input, shape index: {}]
  %s1 = inlined_call_operand.hbm [shape: bf16[128,256], index: 1, kind: input, shape index: {}]
  %s2 = inlined_call_operand.hbm [shape: f32[1,256], index: 2, kind: input, shape index: {}]
  %s3 = inlined_call_operand.hbm [shape: bf16[256,128], index: 3, kind: input, shape index: {}]
  %s4 = inlined_call_operand.vmem [shape: f32[1,128], index: 4, kind: input, shape index: {}]
  %s5 = inlined_call_operand.hbm [shape: f32[256,128], index: 5, kind: output, shape index: {}]
  %s6 = sld [smem:[#allocation0]]
  $region69: #{tpu_custom_call.1} parent=0
    _
  %s8 = ssub.s32 1, %s6
  %s9 = scalar_select 0, %s8, %s6
  $region1: #{tpu_custom_call.1} parent=0
    #allocation2 [shape = 'u8[131072]{0}', space=vmem, size = 0x20000, scoped, tag = 'input window, operand 0']
    #allocation3 [shape = 's32[2]{0}', space=sflag, size = 0x8, scoped, tag = 'scoped memory for tpu_custom_call.1']
    #allocation4 [shape = 's32[2]{0}', space=sflag, size = 0x8, scoped, tag = 'scoped memory for tpu_custom_call.1']
    #allocation5 [shape = 'u8[65536]{0}', space=vmem, size = 0x10000, scoped, tag = 'input window, operand 1, single buffered']
    #allocation6 [shape = 's32[1]{0}', space=sflag, size = 0x4, scoped, tag = 'scoped memory for tpu_custom_call.1']
    #allocation7 [shape = 'u8[1024]{0}', space=vmem, size = 0x400, scoped, tag = 'input window, operand 2, single buffered']
    #allocation8 [shape = 'u8[65536]{0}', space=vmem, size = 0x10000, scoped, tag = 'input window, operand 3, single buffered']
    #allocation9 [shape = 's32[1]{0}', space=sflag, size = 0x4, scoped, tag = 'scoped memory for tpu_custom_call.1']
    #allocation10 [shape = 'u8[131072]{0}', space=vmem, size = 0x20000, scoped, tag = 'output window, operand 0']
    %10 = vsyncpa [#allocation3], 0
    %s11 = scalar_lea.sflag [#allocation3], 1
    %12 = vsyncpa %s11, 0
    %13 = vsyncpa [#allocation6], 0
    %14 = vsyncpa [#allocation9], 0
    %15 = vsyncpa [#allocation4], 0
    %s16 = scalar_lea.sflag [#allocation4], 1
    %17 = vsyncpa %s16, 0
    loop: start=0, step=1, limit=4
    $region2: #{tpu_custom_call.1} parent=1 // loop_pre_header
      _
    $region3: #{tpu_custom_call.1} parent=1 // loop_header
      %s19 = sphi 0, %s23
      %p20 = scmp.ge.s32.totalorder %s19, 4
      %s29 = sphi 0, %s31
      %s32 = sphi 0, %s29
      %s33 = sphi 0, %s32
      %s49 = sphi 0, %s33
      %s53 = sphi 0, %s53
      %s55 = sphi 0, %s53
      %s56 = sphi 0, %s55
      %s70 = sphi 0, %s56
      %s74 = sphi 0, %s74
      %s76 = sphi 0, %s74
      %s77 = sphi 0, %s76
      %s91 = sphi 0, %s77
      %s95 = sphi 0, %s95
      %s97 = sphi 0, %s95
      %s98 = sphi 0, %s97
      %s112 = sphi 0, %s98
      %s116 = sphi 0, %s116
      %s118 = sphi 0, %s116
      %s119 = sphi 0, %s118
      %s133 = sphi 0, %s119
      %s139 = sphi 0, %s141
      %s142 = sphi 0, %s139
      %s143 = sphi 0, %s142
      %s159 = sphi 0, %s143
    $region4: #{tpu_custom_call.1} parent=1 // loop_header_branch
      %22 = sbr.rel (%p20) target = $region8
    $region5: #{tpu_custom_call.1} parent=1 // loop_body
      %s24 = ssub.s32 %s19, 1
      %s25 = ssub.s32 %s19, 2
      %s26 = sadd.s32 %s19, 1
      %s27 = ssub.s32 %s19, %s26
      %p28 = scmp.eq.s32.totalorder %s27, 0
      %s30 = sadd.s32 %s29, 1
      %s31 = scalar_select %p28, %s29, %s30
      %p34 = pneg %p28
      %p35 = scmp.eq.s32.totalorder %s19, 1
      %p36 = por %p34, %p35
      %p37 = scmp.ne.s32.totalorder %s29, %s32
      %p38 = scmp.eq.s32.totalorder %s19, 0
      %p39 = por %p37, %p38
      %p40 = scmp.ne.s32.totalorder %s29, %s32
      %p41 = scmp.eq.s32.totalorder %s24, 1
      %p42 = por %p40, %p41
      %p43 = scmp.ne.s32.totalorder %s32, %s33
      %p44 = scmp.eq.s32.totalorder %s24, 0
      %p45 = por %p43, %p44
      %p46 = scmp.ne.s32.totalorder %s32, %s33
      %p47 = scmp.eq.s32.totalorder %s25, 1
      %p48 = por %p46, %p47
      %p50 = scmp.ne.s32.totalorder %s33, %s49
      %p51 = scmp.eq.s32.totalorder %s25, 0
      %p52 = por %p50, %p51
      %s54 = sadd.s32 %s53, 1
      %p57 = scmp.eq.s32.totalorder %s19, 1
      %p58 = scmp.ne.s32.totalorder %s53, %s55
      %p59 = scmp.eq.s32.totalorder %s19, 0
      %p60 = por %p58, %p59
      %p61 = scmp.ne.s32.totalorder %s53, %s55
      %p62 = scmp.eq.s32.totalorder %s24, 1
      %p63 = por %p61, %p62
      %p64 = scmp.ne.s32.totalorder %s55, %s56
      %p65 = scmp.eq.s32.totalorder %s24, 0
      %p66 = por %p64, %p65
      %p67 = scmp.ne.s32.totalorder %s55, %s56
      %p68 = scmp.eq.s32.totalorder %s25, 1
      %p69 = por %p67, %p68
      %p71 = scmp.ne.s32.totalorder %s56, %s70
      %p72 = scmp.eq.s32.totalorder %s25, 0
      %p73 = por %p71, %p72
      %s75 = sadd.s32 %s74, 1
      %p78 = scmp.eq.s32.totalorder %s19, 1
      %p79 = scmp.ne.s32.totalorder %s74, %s76
      %p80 = scmp.eq.s32.totalorder %s19, 0
      %p81 = por %p79, %p80
      %p82 = scmp.ne.s32.totalorder %s74, %s76
      %p83 = scmp.eq.s32.totalorder %s24, 1
      %p84 = por %p82, %p83
      %p85 = scmp.ne.s32.totalorder %s76, %s77
      %p86 = scmp.eq.s32.totalorder %s24, 0
      %p87 = por %p85, %p86
      %p88 = scmp.ne.s32.totalorder %s76, %s77
      %p89 = scmp.eq.s32.totalorder %s25, 1
      %p90 = por %p88, %p89
      %p92 = scmp.ne.s32.totalorder %s77, %s91
      %p93 = scmp.eq.s32.totalorder %s25, 0
      %p94 = por %p92, %p93
      %s96 = sadd.s32 %s95, 1
      %p99 = scmp.eq.s32.totalorder %s19, 1
      %p100 = scmp.ne.s32.totalorder %s95, %s97
      %p101 = scmp.eq.s32.totalorder %s19, 0
      %p102 = por %p100, %p101
      %p103 = scmp.ne.s32.totalorder %s95, %s97
      %p104 = scmp.eq.s32.totalorder %s24, 1
      %p105 = por %p103, %p104
      %p106 = scmp.ne.s32.totalorder %s97, %s98
      %p107 = scmp.eq.s32.totalorder %s24, 0
      %p108 = por %p106, %p107
      %p109 = scmp.ne.s32.totalorder %s97, %s98
      %p110 = scmp.eq.s32.totalorder %s25, 1
      %p111 = por %p109, %p110
      %p113 = scmp.ne.s32.totalorder %s98, %s112
      %p114 = scmp.eq.s32.totalorder %s25, 0
      %p115 = por %p113, %p114
      %s117 = sadd.s32 %s116, 1
      %p120 = scmp.eq.s32.totalorder %s19, 1
      %p121 = scmp.ne.s32.totalorder %s116, %s118
      %p122 = scmp.eq.s32.totalorder %s19, 0
      %p123 = por %p121, %p122
      %p124 = scmp.ne.s32.totalorder %s116, %s118
      %p125 = scmp.eq.s32.totalorder %s24, 1
      %p126 = por %p124, %p125
      %p127 = scmp.ne.s32.totalorder %s118, %s119
      %p128 = scmp.eq.s32.totalorder %s24, 0
      %p129 = por %p127, %p128
      %p130 = scmp.ne.s32.totalorder %s118, %s119
      %p131 = scmp.eq.s32.totalorder %s25, 1
      %p132 = por %p130, %p131
      %p134 = scmp.ne.s32.totalorder %s119, %s133
      %p135 = scmp.eq.s32.totalorder %s25, 0
      %p136 = por %p134, %p135
      %s137 = ssub.s32 %s19, %s26
      %p138 = scmp.eq.s32.totalorder %s137, 0
      %s140 = sadd.s32 %s139, 1
      %s141 = scalar_select %p138, %s139, %s140
      %p144 = pneg %p138
      %p145 = scmp.eq.s32.totalorder %s19, 1
      %p146 = por %p144, %p145
      %p147 = scmp.ne.s32.totalorder %s139, %s142
      %p148 = scmp.eq.s32.totalorder %s19, 0
      %p149 = por %p147, %p148
      %p150 = scmp.ne.s32.totalorder %s139, %s142
      %p151 = scmp.eq.s32.totalorder %s24, 1
      %p152 = por %p150, %p151
      %p153 = scmp.ne.s32.totalorder %s142, %s143
      %p154 = scmp.eq.s32.totalorder %s24, 0
      %p155 = por %p153, %p154
      %p156 = scmp.ne.s32.totalorder %s142, %s143
      %p157 = scmp.eq.s32.totalorder %s25, 1
      %p158 = por %p156, %p157
      %p160 = scmp.ne.s32.totalorder %s143, %s159
      %p161 = scmp.eq.s32.totalorder %s25, 0
      %p162 = por %p160, %p161
      %p163 = scmp.le.s32.totalorder 1, %s19
      %p164 = scmp.lt.s32.totalorder %s19, 3
      %p165 = pnand %p163, %p164
      %p166 = pneg %p165
      // Predicated region
      $region9: #{tpu_custom_call.1} parent=5 // pred_check
        _
      $region10: #{tpu_custom_call.1} parent=5 // pred_check_branch
        %168 = sbr.rel (%p165) target = $region12
      $region11: #{tpu_custom_call.1} parent=5 // pred_region
        %s169 = ssub.s32 %s19, 1
        // Predicated region
        $region13: #{tpu_custom_call.1} parent=11 // pred_check
          %p170 = pneg %p66
        $region14: #{tpu_custom_call.1} parent=11 // pred_check_branch
          %172 = sbr.rel (%p170) target = $region16
        $region15: #{tpu_custom_call.1} parent=11 // pred_region
          %174 = vsyncadd [#allocation6], 0
          %s175 = sshll.u32 %s1, 4
          %s176 = int_to_ptr.hbm [resolvable:$true] %s175
          %s177 = sshll.u32 [#allocation5], 4
          %s178 = int_to_ptr.vmem [resolvable:$true] %s177
          %183 = dma.hbm_to_vmem [thread:$0]  %s176, 2048, %s178, [#allocation6], 128, 128, 8
        $region16: #{tpu_custom_call.1} parent=11 // pred_fallthru
          _
        // Predicated region
        $region17: #{tpu_custom_call.1} parent=11 // pred_check
          %p184 = pneg %p87
        $region18: #{tpu_custom_call.1} parent=11 // pred_check_branch
          %186 = sbr.rel (%p184) target = $region20
        $region19: #{tpu_custom_call.1} parent=11 // pred_region
          %188 = vsyncadd [#allocation6], 0
          %s190 = sshll.u32 %s2, 4
          %s191 = int_to_ptr.hbm [resolvable:$true] %s190
          %s192 = sshll.u32 [#allocation7], 4
          %s193 = int_to_ptr.vmem [resolvable:$true] %s192
          %195 = dma.hbm_to_vmem [thread:$0]  %s191, 32, %s193, [#allocation6]
        $region20: #{tpu_custom_call.1} parent=11 // pred_fallthru
          _
        // Predicated region
        $region21: #{tpu_custom_call.1} parent=11 // pred_check
          %p196 = pneg %p108
        $region22: #{tpu_custom_call.1} parent=11 // pred_check_branch
          %198 = sbr.rel (%p196) target = $region24
        $region23: #{tpu_custom_call.1} parent=11 // pred_region
          %200 = vsyncadd [#allocation9], 0
          %s201 = sshll.u32 %s3, 4
          %s202 = int_to_ptr.hbm [resolvable:$true] %s201
          %s203 = sshll.u32 [#allocation8], 4
          %s204 = int_to_ptr.vmem [resolvable:$true] %s203
          %209 = dma.hbm_to_vmem [thread:$0]  %s202, 2048, %s204, [#allocation9], 64, 64, 4
        $region24: #{tpu_custom_call.1} parent=11 // pred_fallthru
          _
        // Predicated region
        $region25: #{tpu_custom_call.1} parent=11 // pred_check
          %p210 = pneg %p129
        $region26: #{tpu_custom_call.1} parent=11 // pred_check_branch
          %212 = sbr.rel (%p210) target = $region28
        $region27: #{tpu_custom_call.1} parent=11 // pred_region
          _
        $region28: #{tpu_custom_call.1} parent=11 // pred_fallthru
          _
      $region12: #{tpu_custom_call.1} parent=5 // pred_fallthru
        _
      %p213 = scmp.lt.s32.totalorder %s19, 2
      // Predicated region
      $region29: #{tpu_custom_call.1} parent=5 // pred_check
        %p214 = pneg %p213
      $region30: #{tpu_custom_call.1} parent=5 // pred_check_branch
        %216 = sbr.rel (%p214) target = $region32
      $region31: #{tpu_custom_call.1} parent=5 // pred_region
        // Predicated region
        $region33: #{tpu_custom_call.1} parent=31 // pred_check
          %p217 = pneg %p39
        $region34: #{tpu_custom_call.1} parent=31 // pred_check_branch
          %219 = sbr.rel (%p217) target = $region36
        $region35: #{tpu_custom_call.1} parent=31 // pred_region
          %s220 = sand.u32 %s29, 1
          %s221 = scalar_lea.sflag [#allocation3], %s220
          %s222 = sand.u32 %s29, 1
          %s223 = smul.addr %s222, 128
          %s224 = scalar_lea.vmem [#allocation2], %s223
          %s225 = smul.u32 16, %s19
          %227 = vsyncadd %s221, 0
          %s228 = smul.addr %s225, 8
          %s229 = scalar_lea.hbm %s0, %s228
          %s230 = sshll.u32 %s229, 4
          %s231 = int_to_ptr.hbm [resolvable:$true] %s230
          %s232 = sshll.u32 %s224, 4
          %s233 = int_to_ptr.vmem [resolvable:$true] %s232
          %238 = dma.hbm_to_vmem [thread:$0]  %s231, 2048, %s233, %s221, 128, 128, 8
        $region36: #{tpu_custom_call.1} parent=31 // pred_fallthru
          _
      $region32: #{tpu_custom_call.1} parent=5 // pred_fallthru
        _
      %p239 = scmp.le.s32.totalorder 1, %s19
      %p240 = scmp.lt.s32.totalorder %s19, 3
      %p241 = pnand %p239, %p240
      %p242 = pneg %p241
      // Predicated region
      $region37: #{tpu_custom_call.1} parent=5 // pred_check
        _
      $region38: #{tpu_custom_call.1} parent=5 // pred_check_branch
        %244 = sbr.rel (%p241) target = $region40
      $region39: #{tpu_custom_call.1} parent=5 // pred_region
        %s245 = ssub.s32 %s19, 1
        %s246 = sand.u32 %s32, 1
        %s247 = scalar_lea.sflag [#allocation3], %s246
        %s248 = sand.u32 %s32, 1
        %s249 = smul.addr %s248, 128
        %s250 = scalar_lea.vmem [#allocation2], %s249
        // Predicated region
        $region41: #{tpu_custom_call.1} parent=39 // pred_check
          %p251 = pneg %p45
        $region42: #{tpu_custom_call.1} parent=39 // pred_check_branch
          %253 = sbr.rel (%p251) target = $region44
        $region43: #{tpu_custom_call.1} parent=39 // pred_region
          %255 = dma.done %s247, 2048
        $region44: #{tpu_custom_call.1} parent=39 // pred_fallthru
          _
        // Predicated region
        $region45: #{tpu_custom_call.1} parent=39 // pred_check
          %p256 = pneg %p66
        $region46: #{tpu_custom_call.1} parent=39 // pred_check_branch
          %258 = sbr.rel (%p256) target = $region48
        $region47: #{tpu_custom_call.1} parent=39 // pred_region
          %260 = dma.done [#allocation6], 2048
        $region48: #{tpu_custom_call.1} parent=39 // pred_fallthru
          _
        // Predicated region
        $region49: #{tpu_custom_call.1} parent=39 // pred_check
          %p261 = pneg %p87
        $region50: #{tpu_custom_call.1} parent=39 // pred_check_branch
          %263 = sbr.rel (%p261) target = $region52
        $region51: #{tpu_custom_call.1} parent=39 // pred_region
          %265 = dma.done [#allocation6], 32
        $region52: #{tpu_custom_call.1} parent=39 // pred_fallthru
          _
        // Predicated region
        $region53: #{tpu_custom_call.1} parent=39 // pred_check
          %p266 = pneg %p108
        $region54: #{tpu_custom_call.1} parent=39 // pred_check_branch
          %268 = sbr.rel (%p266) target = $region56
        $region55: #{tpu_custom_call.1} parent=39 // pred_region
          %270 = dma.done [#allocation9], 2048
        $region56: #{tpu_custom_call.1} parent=39 // pred_fallthru
          _
        %s271 = sand.u32 %s32, 1
        %s272 = scalar_lea.sflag [#allocation3], %s271
        %s273 = sand.u32 %s32, 1
        %s274 = smul.addr %s273, 128
        %s275 = scalar_lea.vmem [#allocation2], %s274
        %p276 = pneg %p45
        %p277 = pneg %p42
        %p278 = pneg %p66
        %p279 = pneg %p63
        %p280 = pneg %p87
        %p281 = pneg %p84
        %p282 = pneg %p108
        %p283 = pneg %p105
        %p284 = pneg %p129
        %p285 = pneg %p126
        %p286 = pneg %p155
        %p287 = pneg %p152
        %s288 = sand.u32 %s142, 1
        %s289 = scalar_lea.sflag [#allocation4], %s288
        %s290 = sand.u32 %s142, 1
        %s291 = smul.addr %s290, 128
        %s292 = scalar_lea.vmem [#allocation10], %s291
        %s293 = smul.u32 16, %s24
        %s294 = smul.u32 16, %s24
        %v295 = vld [vmem:[%s250] sm:$0xff]
        %v296 = vld [vmem:[%s250 + $0x8] sm:$0xff]
        %v297 = vld [vmem:[%s250 + $0x10] sm:$0xff]
        %v298 = vld [vmem:[%s250 + $0x18] sm:$0xff]
        %v299 = vld [vmem:[%s250 + $0x20] sm:$0xff]
        %v300 = vld [vmem:[%s250 + $0x28] sm:$0xff]
        %v301 = vld [vmem:[%s250 + $0x30] sm:$0xff]
        %v302 = vld [vmem:[%s250 + $0x38] sm:$0xff]
        %v303 = vld [vmem:[%s250 + $0x40] sm:$0xff]
        %v304 = vld [vmem:[%s250 + $0x48] sm:$0xff]
        %v305 = vld [vmem:[%s250 + $0x50] sm:$0xff]
        %v306 = vld [vmem:[%s250 + $0x58] sm:$0xff]
        %v307 = vld [vmem:[%s250 + $0x60] sm:$0xff]
        %v308 = vld [vmem:[%s250 + $0x68] sm:$0xff]
        %v309 = vld [vmem:[%s250 + $0x70] sm:$0xff]
        %v310 = vld [vmem:[%s250 + $0x78] sm:$0xff]
        %v311 = vpack.c.bf16 %v296, %v295
        %v312 = vpack.c.bf16 %v298, %v297
        %v313 = vpack.c.bf16 %v300, %v299
        %v314 = vpack.c.bf16 %v302, %v301
        %v315 = vpack.c.bf16 %v304, %v303
        %v316 = vpack.c.bf16 %v306, %v305
        %v317 = vpack.c.bf16 %v308, %v307
        %v318 = vpack.c.bf16 %v310, %v309
        %v319 = vld [vmem:[#allocation5] sm:$0xff]
        %v320 = vld [vmem:[#allocation5 + $0x8] sm:$0xff]
        %v321 = vld [vmem:[#allocation5 + $0x10] sm:$0xff]
        %v322 = vld [vmem:[#allocation5 + $0x18] sm:$0xff]
        %v323 = vld [vmem:[#allocation5 + $0x20] sm:$0xff]
        %v324 = vld [vmem:[#allocation5 + $0x28] sm:$0xff]
        %v325 = vld [vmem:[#allocation5 + $0x30] sm:$0xff]
        %v326 = vld [vmem:[#allocation5 + $0x38] sm:$0xff]
        %v327 = vld [vmem:[#allocation5 + $0x40] sm:$0xff]
        %v328 = vld [vmem:[#allocation5 + $0x48] sm:$0xff]
        %v329 = vld [vmem:[#allocation5 + $0x50] sm:$0xff]
        %v330 = vld [vmem:[#allocation5 + $0x58] sm:$0xff]
        %v331 = vld [vmem:[#allocation5 + $0x60] sm:$0xff]
        %v332 = vld [vmem:[#allocation5 + $0x68] sm:$0xff]
        %v333 = vld [vmem:[#allocation5 + $0x70] sm:$0xff]
        %v334 = vld [vmem:[#allocation5 + $0x78] sm:$0xff]
        %v335 = vld [vmem:[#allocation7] sm:$0x3]
        %v337 = vperm.slane %v335, 0
        %v338 = vperm.slane %v335, 1
        %v357 = vunpack.c.l.b16 %v319
        %v358 = vunpack.c.h.b16 %v319
        %v359 = vunpack.c.l.b16 %v320
        %v360 = vunpack.c.h.b16 %v320
        %v361 = vunpack.c.l.b16 %v321
        %v362 = vunpack.c.h.b16 %v321
        %v363 = vunpack.c.l.b16 %v322
        %v364 = vunpack.c.h.b16 %v322
        %v365 = vunpack.c.l.b16 %v323
        %v366 = vunpack.c.h.b16 %v323
        %v367 = vunpack.c.l.b16 %v324
        %v368 = vunpack.c.h.b16 %v324
        %v369 = vunpack.c.l.b16 %v325
        %v370 = vunpack.c.h.b16 %v325
        %v371 = vunpack.c.l.b16 %v326
        %v372 = vunpack.c.h.b16 %v326
        %v373 = vunpack.c.l.b16 %v327
        %v374 = vunpack.c.h.b16 %v327
        %v375 = vunpack.c.l.b16 %v328
        %v376 = vunpack.c.h.b16 %v328
        %v377 = vunpack.c.l.b16 %v329
        %v378 = vunpack.c.h.b16 %v329
        %v379 = vunpack.c.l.b16 %v330
        %v380 = vunpack.c.h.b16 %v330
        %v381 = vunpack.c.l.b16 %v331
        %v382 = vunpack.c.h.b16 %v331
        %v383 = vunpack.c.l.b16 %v332
        %v384 = vunpack.c.h.b16 %v332
        %v385 = vunpack.c.l.b16 %v333
        %v386 = vunpack.c.h.b16 %v333
        %v387 = vunpack.c.l.b16 %v334
        %v388 = vunpack.c.h.b16 %v334
        %v389 = vpack.c.b16 %v359, %v357
        %v390 = vpack.c.b16 %v360, %v358
        %v391 = vpack.c.b16 %v363, %v361
        %v392 = vpack.c.b16 %v364, %v362
        %v393 = vpack.c.b16 %v367, %v365
        %v394 = vpack.c.b16 %v368, %v366
        %v395 = vpack.c.b16 %v371, %v369
        %v396 = vpack.c.b16 %v372, %v370
        %v397 = vpack.c.b16 %v375, %v373
        %v398 = vpack.c.b16 %v376, %v374
        %v399 = vpack.c.b16 %v379, %v377
        %v400 = vpack.c.b16 %v380, %v378
        %v401 = vpack.c.b16 %v383, %v381
        %v402 = vpack.c.b16 %v384, %v382
        %v403 = vpack.c.b16 %v387, %v385
        %v404 = vpack.c.b16 %v388, %v386
        %421 = vmatpush.bf16.msra.mxu0 %v403
        %422 = vmatpush.bf16.msra.mxu0 %v401
        %423 = vmatpush.bf16.msra.mxu0 %v399
        %424 = vmatpush.bf16.msra.mxu0 %v397
        %425 = vmatpush.bf16.msra.mxu0 %v395
        %426 = vmatpush.bf16.msra.mxu0 %v393
        %427 = vmatpush.bf16.msra.mxu0 %v391
        %428 = vmatpush.bf16.msra.mxu0 %v389
        %429 = vmatmul.bf16.gmra.mxu0 %v311
        %v430 = vpop.f32.mrf.mxu0
        %v431 = vadd.f32 %v337, %v430
        %v432 = vpop.f32.mrf.mxu0
        %v433 = vadd.f32 %v337, %v432
        %434 = vmatmul.bf16.gmra.mxu0 %v312
        %v435 = vpop.f32.mrf.mxu0
        %v436 = vadd.f32 %v337, %v435
        %v437 = vpop.f32.mrf.mxu0
        %v438 = vadd.f32 %v337, %v437
        %439 = vmatmul.bf16.gmra.mxu0 %v313
        %v440 = vpop.f32.mrf.mxu0
        %v441 = vadd.f32 %v337, %v440
        %v442 = vpop.f32.mrf.mxu0
        %v443 = vadd.f32 %v337, %v442
        %444 = vmatmul.bf16.gmra.mxu0 %v314
        %v445 = vpop.f32.mrf.mxu0
        %v446 = vadd.f32 %v337, %v445
        %v447 = vpop.f32.mrf.mxu0
        %v448 = vadd.f32 %v337, %v447
        %449 = vmatmul.bf16.gmra.mxu0 %v315
        %v450 = vpop.f32.mrf.mxu0
        %v451 = vadd.f32 %v337, %v450
        %v452 = vpop.f32.mrf.mxu0
        %v453 = vadd.f32 %v337, %v452
        %454 = vmatmul.bf16.gmra.mxu0 %v316
        %v455 = vpop.f32.mrf.mxu0
        %v456 = vadd.f32 %v337, %v455
        %v457 = vpop.f32.mrf.mxu0
        %v458 = vadd.f32 %v337, %v457
        %459 = vmatmul.bf16.gmra.mxu0 %v317
        %v460 = vpop.f32.mrf.mxu0
        %v461 = vadd.f32 %v337, %v460
        %v462 = vpop.f32.mrf.mxu0
        %v463 = vadd.f32 %v337, %v462
        %464 = vmatmul.bf16.gmra.mxu0 %v318
        %v465 = vpop.f32.mrf.mxu0
        %v466 = vadd.f32 %v337, %v465
        %v467 = vpop.f32.mrf.mxu0
        %v468 = vadd.f32 %v337, %v467
        %469 = vdwg.mxu0
        %470 = vmatpush.bf16.msra.mxu0 %v404
        %471 = vmatpush.bf16.msra.mxu0 %v402
        %472 = vmatpush.bf16.msra.mxu0 %v400
        %473 = vmatpush.bf16.msra.mxu0 %v398
        %474 = vmatpush.bf16.msra.mxu0 %v396
        %475 = vmatpush.bf16.msra.mxu0 %v394
        %476 = vmatpush.bf16.msra.mxu0 %v392
        %477 = vmatpush.bf16.msra.mxu0 %v390
        %478 = vmatmul.bf16.gmra.mxu0 %v311
        %v479 = vpop.f32.mrf.mxu0
        %v480 = vadd.f32 %v338, %v479
        %v481 = vpop.f32.mrf.mxu0
        %v482 = vadd.f32 %v338, %v481
        %483 = vmatmul.bf16.gmra.mxu0 %v312
        %v484 = vpop.f32.mrf.mxu0
        %v485 = vadd.f32 %v338, %v484
        %v486 = vpop.f32.mrf.mxu0
        %v487 = vadd.f32 %v338, %v486
        %488 = vmatmul.bf16.gmra.mxu0 %v313
        %v489 = vpop.f32.mrf.mxu0
        %v490 = vadd.f32 %v338, %v489
        %v491 = vpop.f32.mrf.mxu0
        %v492 = vadd.f32 %v338, %v491
        %493 = vmatmul.bf16.gmra.mxu0 %v314
        %v494 = vpop.f32.mrf.mxu0
        %v495 = vadd.f32 %v338, %v494
        %v496 = vpop.f32.mrf.mxu0
        %v497 = vadd.f32 %v338, %v496
        %498 = vmatmul.bf16.gmra.mxu0 %v315
        %v499 = vpop.f32.mrf.mxu0
        %v500 = vadd.f32 %v338, %v499
        %v501 = vpop.f32.mrf.mxu0
        %v502 = vadd.f32 %v338, %v501
        %503 = vmatmul.bf16.gmra.mxu0 %v316
        %v504 = vpop.f32.mrf.mxu0
        %v505 = vadd.f32 %v338, %v504
        %v506 = vpop.f32.mrf.mxu0
        %v507 = vadd.f32 %v338, %v506
        %508 = vmatmul.bf16.gmra.mxu0 %v317
        %v509 = vpop.f32.mrf.mxu0
        %v510 = vadd.f32 %v338, %v509
        %v511 = vpop.f32.mrf.mxu0
        %v512 = vadd.f32 %v338, %v511
        %513 = vmatmul.bf16.gmra.mxu0 %v318
        %v514 = vpop.f32.mrf.mxu0
        %v515 = vadd.f32 %v338, %v514
        %v516 = vpop.f32.mrf.mxu0
        %v517 = vadd.f32 %v338, %v516
        %518 = vdwg.mxu0
        %v519 = vmax.f32 %v431, 0.0
        %v520 = vmax.f32 %v480, 0.0
        %v521 = vmax.f32 %v433, 0.0
        %v522 = vmax.f32 %v482, 0.0
        %v523 = vmax.f32 %v436, 0.0
        %v524 = vmax.f32 %v485, 0.0
        %v525 = vmax.f32 %v438, 0.0
        %v526 = vmax.f32 %v487, 0.0
        %v527 = vmax.f32 %v441, 0.0
        %v528 = vmax.f32 %v490, 0.0
        %v529 = vmax.f32 %v443, 0.0
        %v530 = vmax.f32 %v492, 0.0
        %v531 = vmax.f32 %v446, 0.0
        %v532 = vmax.f32 %v495, 0.0
        %v533 = vmax.f32 %v448, 0.0
        %v534 = vmax.f32 %v497, 0.0
        %v535 = vmax.f32 %v451, 0.0
        %v536 = vmax.f32 %v500, 0.0
        %v537 = vmax.f32 %v453, 0.0
        %v538 = vmax.f32 %v502, 0.0
        %v539 = vmax.f32 %v456, 0.0
        %v540 = vmax.f32 %v505, 0.0
        %v541 = vmax.f32 %v458, 0.0
        %v542 = vmax.f32 %v507, 0.0
        %v543 = vmax.f32 %v461, 0.0
        %v544 = vmax.f32 %v510, 0.0
        %v545 = vmax.f32 %v463, 0.0
        %v546 = vmax.f32 %v512, 0.0
        %v547 = vmax.f32 %v466, 0.0
        %v548 = vmax.f32 %v515, 0.0
        %v549 = vmax.f32 %v468, 0.0
        %v550 = vmax.f32 %v517, 0.0
        %v551 = vpack.c.bf16 %v521, %v519
        %v552 = vpack.c.bf16 %v522, %v520
        %v553 = vpack.c.bf16 %v525, %v523
        %v554 = vpack.c.bf16 %v526, %v524
        %v555 = vpack.c.bf16 %v529, %v527
        %v556 = vpack.c.bf16 %v530, %v528
        %v557 = vpack.c.bf16 %v533, %v531
        %v558 = vpack.c.bf16 %v534, %v532
        %v559 = vpack.c.bf16 %v537, %v535
        %v560 = vpack.c.bf16 %v538, %v536
        %v561 = vpack.c.bf16 %v541, %v539
        %v562 = vpack.c.bf16 %v542, %v540
        %v563 = vpack.c.bf16 %v545, %v543
        %v564 = vpack.c.bf16 %v546, %v544
        %v565 = vpack.c.bf16 %v549, %v547
        %v566 = vpack.c.bf16 %v550, %v548
        %v567 = vld [vmem:[#allocation8] sm:$0xf]
        %v568 = vld [vmem:[#allocation8 + $0x4] sm:$0xf]
        %v569 = vld [vmem:[#allocation8 + $0x8] sm:$0xf]
        %v570 = vld [vmem:[#allocation8 + $0xc] sm:$0xf]
        %v571 = vld [vmem:[#allocation8 + $0x10] sm:$0xf]
        %v572 = vld [vmem:[#allocation8 + $0x14] sm:$0xf]
        %v573 = vld [vmem:[#allocation8 + $0x18] sm:$0xf]
        %v574 = vld [vmem:[#allocation8 + $0x1c] sm:$0xf]
        %v575 = vld [vmem:[#allocation8 + $0x20] sm:$0xf]
        %v576 = vld [vmem:[#allocation8 + $0x24] sm:$0xf]
        %v577 = vld [vmem:[#allocation8 + $0x28] sm:$0xf]
        %v578 = vld [vmem:[#allocation8 + $0x2c] sm:$0xf]
        %v579 = vld [vmem:[#allocation8 + $0x30] sm:$0xf]
        %v580 = vld [vmem:[#allocation8 + $0x34] sm:$0xf]
        %v581 = vld [vmem:[#allocation8 + $0x38] sm:$0xf]
        %v582 = vld [vmem:[#allocation8 + $0x3c] sm:$0xf]
        %v583 = vld [vmem:[#allocation8 + $0x40] sm:$0xf]
        %v584 = vld [vmem:[#allocation8 + $0x44] sm:$0xf]
        %v585 = vld [vmem:[#allocation8 + $0x48] sm:$0xf]
        %v586 = vld [vmem:[#allocation8 + $0x4c] sm:$0xf]
        %v587 = vld [vmem:[#allocation8 + $0x50] sm:$0xf]
        %v588 = vld [vmem:[#allocation8 + $0x54] sm:$0xf]
        %v589 = vld [vmem:[#allocation8 + $0x58] sm:$0xf]
        %v590 = vld [vmem:[#allocation8 + $0x5c] sm:$0xf]
        %v591 = vld [vmem:[#allocation8 + $0x60] sm:$0xf]
        %v592 = vld [vmem:[#allocation8 + $0x64] sm:$0xf]
        %v593 = vld [vmem:[#allocation8 + $0x68] sm:$0xf]
        %v594 = vld [vmem:[#allocation8 + $0x6c] sm:$0xf]
        %v595 = vld [vmem:[#allocation8 + $0x70] sm:$0xf]
        %v596 = vld [vmem:[#allocation8 + $0x74] sm:$0xf]
        %v597 = vld [vmem:[#allocation8 + $0x78] sm:$0xf]
        %v598 = vld [vmem:[#allocation8 + $0x7c] sm:$0xf]
        %v599 = vld [vmem:[%s4] sm:$0x1]
        %v601 = vperm.slane %v599, 0
        %v635 = vunpack.c.l.b16 %v567
        %v636 = vunpack.c.l.b16 %v568
        %v637 = vunpack.c.l.b16 %v569
        %v638 = vunpack.c.l.b16 %v570
        %v639 = vunpack.c.l.b16 %v571
        %v640 = vunpack.c.l.b16 %v572
        %v641 = vunpack.c.l.b16 %v573
        %v642 = vunpack.c.l.b16 %v574
        %v643 = vunpack.c.l.b16 %v575
        %v644 = vunpack.c.l.b16 %v576
        %v645 = vunpack.c.l.b16 %v577
        %v646 = vunpack.c.l.b16 %v578
        %v647 = vunpack.c.l.b16 %v579
        %v648 = vunpack.c.l.b16 %v580
        %v649 = vunpack.c.l.b16 %v581
        %v650 = vunpack.c.l.b16 %v582
        %v651 = vunpack.c.l.b16 %v583
        %v652 = vunpack.c.l.b16 %v584
        %v653 = vunpack.c.l.b16 %v585
        %v654 = vunpack.c.l.b16 %v586
        %v655 = vunpack.c.l.b16 %v587
        %v656 = vunpack.c.l.b16 %v588
        %v657 = vunpack.c.l.b16 %v589
        %v658 = vunpack.c.l.b16 %v590
        %v659 = vunpack.c.l.b16 %v591
        %v660 = vunpack.c.l.b16 %v592
        %v661 = vunpack.c.l.b16 %v593
        %v662 = vunpack.c.l.b16 %v594
        %v663 = vunpack.c.l.b16 %v595
        %v664 = vunpack.c.l.b16 %v596
        %v665 = vunpack.c.l.b16 %v597
        %v666 = vunpack.c.l.b16 %v598
        %v667 = vpack.c.b16 %v636, %v635
        %v668 = vpack.c.b16 %v638, %v637
        %v669 = vpack.c.b16 %v640, %v639
        %v670 = vpack.c.b16 %v642, %v641
        %v671 = vpack.c.b16 %v644, %v643
        %v672 = vpack.c.b16 %v646, %v645
        %v673 = vpack.c.b16 %v648, %v647
        %v674 = vpack.c.b16 %v650, %v649
        %v675 = vpack.c.b16 %v652, %v651
        %v676 = vpack.c.b16 %v654, %v653
        %v677 = vpack.c.b16 %v656, %v655
        %v678 = vpack.c.b16 %v658, %v657
        %v679 = vpack.c.b16 %v660, %v659
        %v680 = vpack.c.b16 %v662, %v661
        %v681 = vpack.c.b16 %v664, %v663
        %v682 = vpack.c.b16 %v666, %v665
        %699 = vmatpush.bf16.msra.mxu0 %v674
        %700 = vmatpush.bf16.msra.mxu0 %v673
        %701 = vmatpush.bf16.msra.mxu0 %v672
        %702 = vmatpush.bf16.msra.mxu0 %v671
        %703 = vmatpush.bf16.msra.mxu0 %v670
        %704 = vmatpush.bf16.msra.mxu0 %v669
        %705 = vmatpush.bf16.msra.mxu0 %v668
        %706 = vmatpush.bf16.msra.mxu0 %v667
        %707 = vmatmul.bf16.gmra.mxu0 %v551
        %v708 = vpop.f32.mrf.mxu0
        %v709 = vadd.f32 %v601, %v708
        %v710 = vpop.f32.mrf.mxu0
        %v711 = vadd.f32 %v601, %v710
        %712 = vmatmul.bf16.gmra.mxu0 %v553
        %v713 = vpop.f32.mrf.mxu0
        %v714 = vadd.f32 %v601, %v713
        %v715 = vpop.f32.mrf.mxu0
        %v716 = vadd.f32 %v601, %v715
        %717 = vmatmul.bf16.gmra.mxu0 %v555
        %v718 = vpop.f32.mrf.mxu0
        %v719 = vadd.f32 %v601, %v718
        %v720 = vpop.f32.mrf.mxu0
        %v721 = vadd.f32 %v601, %v720
        %722 = vmatmul.bf16.gmra.mxu0 %v557
        %v723 = vpop.f32.mrf.mxu0
        %v724 = vadd.f32 %v601, %v723
        %v725 = vpop.f32.mrf.mxu0
        %v726 = vadd.f32 %v601, %v725
        %727 = vmatmul.bf16.gmra.mxu0 %v559
        %v728 = vpop.f32.mrf.mxu0
        %v729 = vadd.f32 %v601, %v728
        %v730 = vpop.f32.mrf.mxu0
        %v731 = vadd.f32 %v601, %v730
        %732 = vmatmul.bf16.gmra.mxu0 %v561
        %v733 = vpop.f32.mrf.mxu0
        %v734 = vadd.f32 %v601, %v733
        %v735 = vpop.f32.mrf.mxu0
        %v736 = vadd.f32 %v601, %v735
        %737 = vmatmul.bf16.gmra.mxu0 %v563
        %v738 = vpop.f32.mrf.mxu0
        %v739 = vadd.f32 %v601, %v738
        %v740 = vpop.f32.mrf.mxu0
        %v741 = vadd.f32 %v601, %v740
        %742 = vmatmul.bf16.gmra.mxu0 %v565
        %v743 = vpop.f32.mrf.mxu0
        %v744 = vadd.f32 %v601, %v743
        %v745 = vpop.f32.mrf.mxu0
        %v746 = vadd.f32 %v601, %v745
        %747 = vdwg.mxu0
        %748 = vmatpush.bf16.msra.mxu0 %v682
        %749 = vmatpush.bf16.msra.mxu0 %v681
        %750 = vmatpush.bf16.msra.mxu0 %v680
        %751 = vmatpush.bf16.msra.mxu0 %v679
        %752 = vmatpush.bf16.msra.mxu0 %v678
        %753 = vmatpush.bf16.msra.mxu0 %v677
        %754 = vmatpush.bf16.msra.mxu0 %v676
        %755 = vmatpush.bf16.msra.mxu0 %v675
        %756 = vmatmul.bf16.gmra.mxu0 %v552
        %v757 = vpop.f32.mrf.mxu0
        %v758 = vadd.f32 %v709, %v757
        %v759 = vpop.f32.mrf.mxu0
        %v760 = vadd.f32 %v711, %v759
        %761 = vmatmul.bf16.gmra.mxu0 %v554
        %v762 = vpop.f32.mrf.mxu0
        %v763 = vadd.f32 %v714, %v762
        %v764 = vpop.f32.mrf.mxu0
        %v765 = vadd.f32 %v716, %v764
        %766 = vmatmul.bf16.gmra.mxu0 %v556
        %v767 = vpop.f32.mrf.mxu0
        %v768 = vadd.f32 %v719, %v767
        %v769 = vpop.f32.mrf.mxu0
        %v770 = vadd.f32 %v721, %v769
        %771 = vmatmul.bf16.gmra.mxu0 %v558
        %v772 = vpop.f32.mrf.mxu0
        %v773 = vadd.f32 %v724, %v772
        %v774 = vpop.f32.mrf.mxu0
        %v775 = vadd.f32 %v726, %v774
        %776 = vmatmul.bf16.gmra.mxu0 %v560
        %v777 = vpop.f32.mrf.mxu0
        %v778 = vadd.f32 %v729, %v777
        %v779 = vpop.f32.mrf.mxu0
        %v780 = vadd.f32 %v731, %v779
        %781 = vmatmul.bf16.gmra.mxu0 %v562
        %v782 = vpop.f32.mrf.mxu0
        %v783 = vadd.f32 %v734, %v782
        %v784 = vpop.f32.mrf.mxu0
        %v785 = vadd.f32 %v736, %v784
        %786 = vmatmul.bf16.gmra.mxu0 %v564
        %v787 = vpop.f32.mrf.mxu0
        %v788 = vadd.f32 %v739, %v787
        %v789 = vpop.f32.mrf.mxu0
        %v790 = vadd.f32 %v741, %v789
        %791 = vmatmul.bf16.gmra.mxu0 %v566
        %v792 = vpop.f32.mrf.mxu0
        %v793 = vadd.f32 %v744, %v792
        %v794 = vpop.f32.mrf.mxu0
        %v795 = vadd.f32 %v746, %v794
        %796 = vdwg.mxu0
        %797 = vst [vmem:[%s292] sm:$0xff] %v758
        %798 = vst [vmem:[%s292 + $0x8] sm:$0xff] %v760
        %799 = vst [vmem:[%s292 + $0x10] sm:$0xff] %v763
        %800 = vst [vmem:[%s292 + $0x18] sm:$0xff] %v765
        %801 = vst [vmem:[%s292 + $0x20] sm:$0xff] %v768
        %802 = vst [vmem:[%s292 + $0x28] sm:$0xff] %v770
        %803 = vst [vmem:[%s292 + $0x30] sm:$0xff] %v773
        %804 = vst [vmem:[%s292 + $0x38] sm:$0xff] %v775
        %805 = vst [vmem:[%s292 + $0x40] sm:$0xff] %v778
        %806 = vst [vmem:[%s292 + $0x48] sm:$0xff] %v780
        %807 = vst [vmem:[%s292 + $0x50] sm:$0xff] %v783
        %808 = vst [vmem:[%s292 + $0x58] sm:$0xff] %v785
        %809 = vst [vmem:[%s292 + $0x60] sm:$0xff] %v788
        %810 = vst [vmem:[%s292 + $0x68] sm:$0xff] %v790
        %811 = vst [vmem:[%s292 + $0x70] sm:$0xff] %v793
        %812 = vst [vmem:[%s292 + $0x78] sm:$0xff] %v795
        %s813 = sand.u32 %s142, 1
        %s814 = scalar_lea.sflag [#allocation4], %s813
        %s815 = sand.u32 %s142, 1
        %s816 = smul.addr %s815, 128
        %s817 = scalar_lea.vmem [#allocation10], %s816
        // Predicated region
        $region57: #{tpu_custom_call.1} parent=39 // pred_check
          %p818 = pneg %p152
        $region58: #{tpu_custom_call.1} parent=39 // pred_check_branch
          %820 = sbr.rel (%p818) target = $region60
        $region59: #{tpu_custom_call.1} parent=39 // pred_region
          %s821 = smul.u32 16, %s24
          %823 = vsyncadd %s814, 0
          %s824 = smul.addr %s821, 8
          %s825 = scalar_lea.hbm %s5, %s824
          %s826 = sshll.u32 %s817, 4
          %s827 = int_to_ptr.vmem [resolvable:$true] %s826
          %s828 = sshll.u32 %s825, 4
          %s829 = int_to_ptr.hbm [resolvable:$true] %s828
          %834 = dma.vmem_to_hbm [thread:$0]  %s827, 2048, %s829, %s814, 128, 128, 8
        $region60: #{tpu_custom_call.1} parent=39 // pred_fallthru
          _
      $region40: #{tpu_custom_call.1} parent=5 // pred_fallthru
        _
      %p835 = scmp.le.s32.totalorder 2, %s19
      // Predicated region
      $region61: #{tpu_custom_call.1} parent=5 // pred_check
        %p836 = pneg %p835
      $region62: #{tpu_custom_call.1} parent=5 // pred_check_branch
        %838 = sbr.rel (%p836) target = $region64
      $region63: #{tpu_custom_call.1} parent=5 // pred_region
        %s839 = ssub.s32 %s19, 2
        // Predicated region
        $region65: #{tpu_custom_call.1} parent=63 // pred_check
          %p840 = pneg %p158
        $region66: #{tpu_custom_call.1} parent=63 // pred_check_branch
          %842 = sbr.rel (%p840) target = $region68
        $region67: #{tpu_custom_call.1} parent=63 // pred_region
          %s843 = sand.u32 %s143, 1
          %s844 = scalar_lea.sflag [#allocation4], %s843
          %s845 = sand.u32 %s143, 1
          %s846 = smul.addr %s845, 128
          %s847 = scalar_lea.vmem [#allocation10], %s846
          %849 = dma.done %s844, 2048
        $region68: #{tpu_custom_call.1} parent=63 // pred_fallthru
          _
      $region64: #{tpu_custom_call.1} parent=5 // pred_fallthru
        _
    $region6: #{tpu_custom_call.1} parent=1 // loop_footer
      %s23 = sadd.s32 1, %s19
    $region7: #{tpu_custom_call.1} parent=1 // loop_footer_branch
      %18 = sbr.rel target = $region3
    $region8: #{tpu_custom_call.1} parent=1 // loop_exit
      _
    %850 = vsyncpa [#allocation3], 1
    %s851 = scalar_lea.sflag [#allocation3], 1
    %852 = vsyncpa %s851, 1
    %853 = vsyncpa [#allocation6], 1
    %854 = vsyncpa [#allocation9], 1
    %855 = vsyncpa [#allocation4], 1
    %s856 = scalar_lea.sflag [#allocation4], 1
    %857 = vsyncpa %s856, 1

</llo_original>
